<compile_context>
chip_gen: v5e
topology: v5e:2x2
jax: 0.10.0
libtpu: 0.0.40
codegen_flags: <defaults>
</compile_context>

<pallas_src>
import math

import jax
import jax.numpy as jnp
from jax.experimental import pallas as pl
from jax.experimental.pallas import tpu as pltpu


# ----------------------------- Pallas kernel ------------------------------ #

def _flip_qubo_kernel(m_ref, q_ref, p_row_ref, s_row_ref, p_col_ref,
                      mq_col_ref, out_ref, acc_ref):
    j = pl.program_id(1)                     # column-tile index (reduction axis)

    @pl.when(j == 0)
    def _init():
        acc_ref[...] = jnp.zeros_like(acc_ref)

    m_ij = m_ref[...]                        # (tm, tn) row/col tile of x[0]
    Q = q_ref[...]                           # (tm, tn) tile of Q
    p_row = p_row_ref[...]                   # (1, tn)  p_j
    s_row = s_row_ref[...]                   # (1, tn)  p_j + m_jj * q_j
    p_col = p_col_ref[...]                   # (tm, 1)  p_i
    mq_col = mq_col_ref[...]                 # (tm, 1)  m_ii * q_i
    q_row = 1.0 - 2.0 * p_row                # derived in-kernel (1 VALU op)
    q_col = 1.0 - 2.0 * p_col

    # inner[i,j] = m_ij q_i q_j  +  p_i (m_jj q_j + p_j)  +  (m_ii q_i) p_j
    inner = m_ij * (q_col * q_row) + p_col * s_row + mq_col * p_row
    weighted = Q * inner

    # Sublane-only reduction per step; cross-lane reduce deferred to finalize.
    acc_ref[...] += jnp.sum(weighted, axis=0, keepdims=True)      # (1, tn)

    @pl.when(j == pl.num_programs(1) - 1)
    def _finalize():
        partial = jnp.sum(acc_ref[...], axis=1, keepdims=True)    # (1, 1)
        out_ref[...] = jnp.broadcast_to(partial, (8, 128))


# ------------------------- tiling / VMEM helpers --------------------------- #

def _round_up(x: int, m: int) -> int:
    return ((x + m - 1) // m) * m


def _vmem_budget():
    """(vmem_limit_bytes, tile_budget_bytes) sized to the local chip."""
    try:
        cap = int(pltpu.get_tpu_info().vmem_capacity_bytes)
    except Exception:
        cap = 64 * 1024 * 1024          # conservative: v7x per-core VMEM
    vmem_limit = max((cap * 3) // 4, 32 * 1024 * 1024)   # 96MiB v5e/v6e, 48MiB v7x
    tile_budget = max(vmem_limit - 8 * 1024 * 1024, 16 * 1024 * 1024)
    return vmem_limit, tile_budget


def _pick_tiles(n: int, tile_budget_bytes: int, tm=None, tn=None):
    """Pick (tm, tn): tn multiple of 128, tm multiple of 8, sized so that
    2 big inputs x 2 pipeline buffers x tm x tn x 4B fits the budget, with
    padding overhead from rounding N up to a tile multiple kept small."""
    max_elems = max(tile_budget_bytes // (2 * 2 * 4), 8 * 128)

    if tn is None:
        cp128 = _round_up(n, 128)
        if cp128 <= 2048:
            tn = cp128                                  # single column tile
        else:
            tn = 128
            for cand in (2048, 1024, 512, 256, 128):
                if _round_up(n, cand) - n <= max(n // 16, 128):
                    tn = cand
                    break
    else:
        tn = _round_up(int(tn), 128)

    if tm is None:
        rp8 = _round_up(n, 8)
        tm_cap = max(8, min(1024, ((max_elems // tn) // 8) * 8))
        if rp8 <= tm_cap:
            tm = rp8                                    # single row tile
        else:
            tm = 8
            for cand in (1024, 512, 256, 128, 64, 32, 16, 8):
                if cand > tm_cap:
                    continue
                if _round_up(n, cand) - n <= max(n // 16, 8):
                    tm = cand
                    break
    else:
        tm = _round_up(int(tm), 8)
    return tm, tn


# ------------------------------ forward paths ------------------------------ #

def _flip_qubo_fused_jax(m_ij, Q, probs, entropy_penalty):
    """Fused pure-JAX path for small N (no Pallas launch overhead)."""
    N = Q.shape[0]
    p = probs[0]
    q = 1.0 - 2.0 * p
    m_d = jnp.diagonal(m_ij)
    inner = (m_ij * (q[:, None] * q[None, :])
             + p[:, None] * (m_d * q + p)[None, :]
             + (m_d * q)[:, None] * p[None, :])
    term = jnp.sum(Q * inner) + jnp.sum(jnp.diagonal(Q) * (p - p * p))
    norm = N * math.log(math.e) / math.e
    eps = 1e-14
    e_p = entropy_penalty * jnp.sum((p + eps) * jnp.log(1.0 / (p + eps))) / norm
    return (term + e_p).reshape(1, 1)


def _flip_qubo_pallas(m_ij, Q, probs, entropy_penalty, *, tm=None, tn=None):
    N = Q.shape[0]
    p = probs                                   # (1, N)
    q = 1.0 - 2.0 * p
    m_diag = jnp.diagonal(m_ij)[None, :]        # (1, N)
    mq = m_diag * q                             # (1, N)  m_ii * q_i
    s_row = p + mq                              # (1, N)  p_j + m_jj * q_j
    q_diag = jnp.diagonal(Q)[None, :]           # (1, N)

    vmem_limit, tile_budget = _vmem_budget()
    tm_, tn_ = _pick_tiles(N, tile_budget, tm, tn)
    Rp, Cp = _round_up(N, tm_), _round_up(N, tn_)

    def pad2(a, r, c):
        if a.shape == (r, c):
            return a
        return jnp.pad(a, ((0, r - a.shape[0]), (0, c - a.shape[1])))

    # Zero-padding is exact: padded Q entries are 0, so they contribute nothing.
    m_p = pad2(m_ij, Rp, Cp)
    q_p = pad2(Q, Rp, Cp)
    p_row = pad2(p, 1, Cp)
    s_row_p = pad2(s_row, 1, Cp)
    p_col = pad2(p.T, Rp, 1)
    mq_col = pad2(mq.T, Rp, 1)

    I, J = Rp // tm_, Cp // tn_

    grid_spec = pltpu.PrefetchScalarGridSpec(
        num_scalar_prefetch=0,
        grid=(I, J),
        in_specs=[
            pl.BlockSpec((tm_, tn_), lambda i, j: (i, j)),   # m_ij tile
            pl.BlockSpec((tm_, tn_), lambda i, j: (i, j)),   # Q tile
            pl.BlockSpec((1, tn_), lambda i, j: (0, j)),     # p (row layout)
            pl.BlockSpec((1, tn_), lambda i, j: (0, j)),     # p + m_diag*q
            pl.BlockSpec((tm_, 1), lambda i, j: (i, 0)),     # p (col layout)
            pl.BlockSpec((tm_, 1), lambda i, j: (i, 0)),     # m_diag*q (col)
        ],
        out_specs=pl.BlockSpec((8, 128), lambda i, j: (i, 0)),
        scratch_shapes=[pltpu.VMEM((1, tn_), jnp.float32)],
    )

    flops = 8 * Rp * Cp
    bytes_accessed = 2 * Rp * Cp * 4 + 2 * Cp * 4 + 2 * Rp * 4 + I * 8 * 128 * 4

    partials = pl.pallas_call(
        _flip_qubo_kernel,
        out_shape=jax.ShapeDtypeStruct((I * 8, 128), jnp.float32),
        grid_spec=grid_spec,
        compiler_params=pltpu.CompilerParams(
            dimension_semantics=("parallel", "arbitrary"),
            vmem_limit_bytes=vmem_limit),
        cost_estimate=pl.CostEstimate(flops=flops, transcendentals=0,
                                      bytes_accessed=bytes_accessed),
    )(m_p, q_p, p_row, s_row_p, p_col, mq_col)

    # O(I) + O(N) closing terms in the wrapper (XLA fuses these; negligible
    # next to the N^2 stream): per-row-tile partials, diag(Q) correction for
    # diag_offset, and the entropy penalty.
    term = jnp.sum(partials[::8, 0])
    diag_corr = jnp.sum(q_diag * (p - p * p))
    norm = N * math.log(math.e) / math.e
    eps = 1e-14
    e_p = entropy_penalty * jnp.sum((p + eps) * jnp.log(1.0 / (p + eps))) / norm
    return (term + diag_corr + e_p).reshape(1, 1)


def flip_model_qubo_forward(x, Q, alphas, entropy_penalty: float = 0.0, *,
                            small_n_threshold: int = 1024, tm=None, tn=None):
    """Pallas implementation of FlipModelQubo.forward.

    x: (B, N, N) (only x[0] is used, as in the PyTorch module)
    Q: (N, N), alphas: (1, N).  Returns (1, 1) float32.
    """
    N = Q.shape[0]
    m_ij = x[0].reshape(-1, N).astype(jnp.float32)
    Q = Q.astype(jnp.float32)
    alphas = alphas.astype(jnp.float32)
    probs = (1.0 + jnp.cos(alphas)) * 0.5        # Parametrisation

    if N <= small_n_threshold:
        return _flip_qubo_fused_jax(m_ij, Q, probs, float(entropy_penalty))
    return _flip_qubo_pallas(m_ij, Q, probs, float(entropy_penalty), tm=tm, tn=tn)


# ------------------------------- reference --------------------------------- #

def _reference_forward(x, Q, alphas, entropy_penalty):
    """Pure-JAX literal mirror of the PyTorch forward (for verification).
    Outer products are written with broadcasting to stay in exact f32."""
    N = Q.shape[0]
    m_ij = x[0].reshape(-1, N)
    m_i = jnp.diagonal(m_ij)
    probs = (1.0 + jnp.cos(alphas)) / 2.0        # (1, N)
    qv = 1.0 - 2.0 * probs
    outer_qq = qv.T * qv                         # == (1-2p)^T (1-2p)
    outer_pq = probs.T * qv                      # == p^T (1-2p)
    outer_pp = probs.T * probs
    term1 = m_ij * outer_qq
    term2 = m_i[None, :] * outer_pq
    term3 = m_i[:, None] * outer_pq.T
    term4 = outer_pp
    diag_offset = jnp.diag(probs[0] - probs[0] ** 2)
    term = jnp.sum((term1 + term2 + term3 + term4 + diag_offset) * Q)
    norm = N * math.log(math.e) / math.e
    eps = 1e-14
    E_p = entropy_penalty * jnp.sum(
        (probs + eps) * jnp.log(1.0 / (probs + eps))) / norm
    return (term + E_p).reshape(1, 1)


# ---------------------------------- test ----------------------------------- #

if __name__ == "__main__":
    key = jax.random.PRNGKey(0)
    k1, k2, k3, k4, k5 = jax.random.split(key, 5)
    B = 2
    entropy_penalty = 0.1

    # 1) Small problem (typical module use): fused pure-JAX path.
    N_small = 16
    Qs = jax.random.normal(k1, (N_small, N_small), dtype=jnp.float32)
    xs = jax.random.uniform(k2, (B, N_small, N_small), dtype=jnp.float32)
    alphas_s = 0.5 * jnp.pi * jnp.ones((1, N_small), dtype=jnp.float32)
    out_s = jax.block_until_ready(
        flip_model_qubo_forward(xs, Qs, alphas_s, entropy_penalty))
    ref_s = _reference_forward(xs, Qs, alphas_s, entropy_penalty)
    assert out_s.shape == (1, 1), out_s.shape
    assert jnp.allclose(out_s, ref_s, rtol=1e-4, atol=1e-4), (out_s, ref_s)

    # 2) Larger problem, forced through the Pallas kernel with a 2x2 grid
    #    (exercises tiling, padding, accumulation and finalize).
    N = 256
    Q = jax.random.normal(k3, (N, N), dtype=jnp.float32)
    x = jax.random.uniform(k4, (B, N, N), dtype=jnp.float32)
    alphas = (0.5 * jnp.pi * jnp.ones((1, N), dtype=jnp.float32)
              + 0.3 * jax.random.normal(k5, (1, N), dtype=jnp.float32))
    out = jax.block_until_ready(
        flip_model_qubo_forward(x, Q, alphas, entropy_penalty,
                                small_n_threshold=0, tm=128, tn=128))
    ref = _reference_forward(x, Q, alphas, entropy_penalty)
    assert out.shape == (1, 1), out.shape
    # Both sides are f32 with different summation orders; allow small slack.
    assert jnp.allclose(out, ref, rtol=1e-3, atol=5e-2), (out, ref)

    print("KERNEL_OK")
</pallas_src>

<mosaic_0001>
module attributes {stable_mosaic.version = 11 : i64} {
  func.func @_flip_qubo_kernel(%arg0: i32, %arg1: i32, %arg2: memref<128x128xf32, #tpu.memory_space<vmem>>, %arg3: memref<128x128xf32, #tpu.memory_space<vmem>>, %arg4: memref<1x128xf32, #tpu.memory_space<vmem>>, %arg5: memref<1x128xf32, #tpu.memory_space<vmem>>, %arg6: memref<128x1xf32, #tpu.memory_space<vmem>>, %arg7: memref<128x1xf32, #tpu.memory_space<vmem>>, %arg8: memref<8x128xf32, #tpu.memory_space<vmem>>, %arg9: memref<1x128xf32, #tpu.memory_space<vmem>>) attributes {dimension_semantics = [#tpu.dimension_semantics<parallel>, #tpu.dimension_semantics<arbitrary>], iteration_bounds = array<i64: 2, 2>, scalar_prefetch = 0 : i64, scratch_operands = 1 : i64, tpu.core_type = #tpu.core_type<tc>, window_params = [{transform_indices = @transform_0, window_bounds = array<i64: 128, 128>}, {transform_indices = @transform_1, window_bounds = array<i64: 128, 128>}, {transform_indices = @transform_2, window_bounds = array<i64: 1, 128>}, {transform_indices = @transform_3, window_bounds = array<i64: 1, 128>}, {transform_indices = @transform_4, window_bounds = array<i64: 128, 1>}, {transform_indices = @transform_5, window_bounds = array<i64: 128, 1>}, {transform_indices = @transform_6, window_bounds = array<i64: 8, 128>}]} {
    %c0_i32 = arith.constant 0 : i32
    %0 = arith.cmpi eq, %arg1, %c0_i32 : i32
    %1 = arith.extui %0 : i1 to i32
    %c0_i32_0 = arith.constant 0 : i32
    %2 = arith.cmpi ne, %1, %c0_i32_0 : i32
    scf.if %2 {
      %cst_21 = arith.constant 0.000000e+00 : f32
      %38 = vector.broadcast %cst_21 : f32 to vector<1x128xf32>
      %c0_22 = arith.constant 0 : index
      %c0_23 = arith.constant 0 : index
      %39 = vector.load %arg9[%c0_22, %c0_23] : memref<1x128xf32, #tpu.memory_space<vmem>>, vector<1x128xf32>
      tpu.vector_store %arg9[%c0_22, %c0_23], %38 {strides = array<i32>} : memref<1x128xf32, #tpu.memory_space<vmem>>, vector<1x128xf32>,
    } else {
    }
    %c0 = arith.constant 0 : index
    %c0_1 = arith.constant 0 : index
    %3 = vector.load %arg2[%c0, %c0_1] : memref<128x128xf32, #tpu.memory_space<vmem>>, vector<128x128xf32>
    %c0_2 = arith.constant 0 : index
    %c0_3 = arith.constant 0 : index
    %4 = vector.load %arg3[%c0_2, %c0_3] : memref<128x128xf32, #tpu.memory_space<vmem>>, vector<128x128xf32>
    %c0_4 = arith.constant 0 : index
    %c0_5 = arith.constant 0 : index
    %5 = vector.load %arg4[%c0_4, %c0_5] : memref<1x128xf32, #tpu.memory_space<vmem>>, vector<1x128xf32>
    %c0_6 = arith.constant 0 : index
    %c0_7 = arith.constant 0 : index
    %6 = vector.load %arg5[%c0_6, %c0_7] : memref<1x128xf32, #tpu.memory_space<vmem>>, vector<1x128xf32>
    %c0_8 = arith.constant 0 : index
    %c0_9 = arith.constant 0 : index
    %7 = vector.load %arg6[%c0_8, %c0_9] : memref<128x1xf32, #tpu.memory_space<vmem>>, vector<128x1xf32>
    %c0_10 = arith.constant 0 : index
    %c0_11 = arith.constant 0 : index
    %8 = vector.load %arg7[%c0_10, %c0_11] : memref<128x1xf32, #tpu.memory_space<vmem>>, vector<128x1xf32>
    %cst = arith.constant 2.000000e+00 : f32
    %9 = vector.broadcast %cst : f32 to vector<1x128xf32>
    %10 = arith.mulf %9, %5 : vector<1x128xf32>
    %cst_12 = arith.constant 1.000000e+00 : f32
    %11 = vector.broadcast %cst_12 : f32 to vector<1x128xf32>
    %12 = arith.subf %11, %10 : vector<1x128xf32>
    %cst_13 = arith.constant 2.000000e+00 : f32
    %13 = vector.broadcast %cst_13 : f32 to vector<128x1xf32>
    %14 = arith.mulf %13, %7 : vector<128x1xf32>
    %cst_14 = arith.constant 1.000000e+00 : f32
    %15 = vector.broadcast %cst_14 : f32 to vector<128x1xf32>
    %16 = arith.subf %15, %14 : vector<128x1xf32>
    %17 = vector.broadcast %16 : vector<128x1xf32> to vector<128x128xf32>
    %18 = vector.broadcast %12 : vector<1x128xf32> to vector<128x128xf32>
    %19 = arith.mulf %17, %18 : vector<128x128xf32>
    %20 = arith.mulf %3, %19 : vector<128x128xf32>
    %21 = vector.broadcast %7 : vector<128x1xf32> to vector<128x128xf32>
    %22 = vector.broadcast %6 : vector<1x128xf32> to vector<128x128xf32>
    %23 = arith.mulf %21, %22 : vector<128x128xf32>
    %24 = arith.addf %20, %23 : vector<128x128xf32>
    %25 = vector.broadcast %8 : vector<128x1xf32> to vector<128x128xf32>
    %26 = vector.broadcast %5 : vector<1x128xf32> to vector<128x128xf32>
    %27 = arith.mulf %25, %26 : vector<128x128xf32>
    %28 = arith.addf %24, %27 : vector<128x128xf32>
    %29 = arith.mulf %4, %28 : vector<128x128xf32>
    %c0_15 = arith.constant 0 : index
    %c0_16 = arith.constant 0 : index
    %30 = vector.load %arg9[%c0_15, %c0_16] : memref<1x128xf32, #tpu.memory_space<vmem>>, vector<1x128xf32>
    %cst_17 = arith.constant dense<0.000000e+00> : vector<128xf32>
    %31 = vector.multi_reduction <add>, %29, %cst_17 [0] : vector<128x128xf32> to vector<128xf32>
    %32 = vector.shape_cast %31 : vector<128xf32> to vector<1x128xf32>
    %33 = arith.addf %30, %32 : vector<1x128xf32>
    %c0_18 = arith.constant 0 : index
    %c0_19 = arith.constant 0 : index
    %34 = vector.load %arg9[%c0_18, %c0_19] : memref<1x128xf32, #tpu.memory_space<vmem>>, vector<1x128xf32>
    tpu.vector_store %arg9[%c0_18, %c0_19], %33 {strides = array<i32>} : memref<1x128xf32, #tpu.memory_space<vmem>>, vector<1x128xf32>,
    %c1_i32 = arith.constant 1 : i32
    %35 = arith.cmpi eq, %arg1, %c1_i32 : i32
    %36 = arith.extui %35 : i1 to i32
    %c0_i32_20 = arith.constant 0 : i32
    %37 = arith.cmpi ne, %36, %c0_i32_20 : i32
    scf.if %37 {
      %c0_21 = arith.constant 0 : index
      %c0_22 = arith.constant 0 : index
      %38 = vector.load %arg9[%c0_21, %c0_22] : memref<1x128xf32, #tpu.memory_space<vmem>>, vector<1x128xf32>
      %cst_23 = arith.constant dense<0.000000e+00> : vector<1xf32>
      %39 = vector.multi_reduction <add>, %38, %cst_23 [1] : vector<1x128xf32> to vector<1xf32>
      %40 = vector.shape_cast %39 : vector<1xf32> to vector<1x1xf32>
      %41 = vector.shape_cast %40 : vector<1x1xf32> to vector<1x1xf32>
      %42 = vector.broadcast %41 : vector<1x1xf32> to vector<8x128xf32>
      %c0_24 = arith.constant 0 : index
      %c0_25 = arith.constant 0 : index
      %43 = vector.load %arg8[%c0_24, %c0_25] : memref<8x128xf32, #tpu.memory_space<vmem>>, vector<8x128xf32>
      tpu.vector_store %arg8[%c0_24, %c0_25], %42 {strides = array<i32>} : memref<8x128xf32, #tpu.memory_space<vmem>>, vector<8x128xf32>,
    } else {
    }
    return
  }
  func.func @transform_0(%arg0: i32, %arg1: i32) -> (i32, i32) {
    %c0_i32 = arith.constant 0 : i32
    return %arg0, %arg1 : i32, i32
  }
  func.func @transform_1(%arg0: i32, %arg1: i32) -> (i32, i32) {
    %c0_i32 = arith.constant 0 : i32
    return %arg0, %arg1 : i32, i32
  }
  func.func @transform_2(%arg0: i32, %arg1: i32) -> (i32, i32) {
    %c0_i32 = arith.constant 0 : i32
    %c0_i32_0 = arith.constant 0 : i32
    return %c0_i32, %arg1 : i32, i32
  }
  func.func @transform_3(%arg0: i32, %arg1: i32) -> (i32, i32) {
    %c0_i32 = arith.constant 0 : i32
    %c0_i32_0 = arith.constant 0 : i32
    return %c0_i32, %arg1 : i32, i32
  }
  func.func @transform_4(%arg0: i32, %arg1: i32) -> (i32, i32) {
    %c0_i32 = arith.constant 0 : i32
    %c0_i32_0 = arith.constant 0 : i32
    return %arg0, %c0_i32 : i32, i32
  }
  func.func @transform_5(%arg0: i32, %arg1: i32) -> (i32, i32) {
    %c0_i32 = arith.constant 0 : i32
    %c0_i32_0 = arith.constant 0 : i32
    return %arg0, %c0_i32 : i32, i32
  }
  func.func @transform_6(%arg0: i32, %arg1: i32) -> (i32, i32) {
    %c0_i32 = arith.constant 0 : i32
    %c0_i32_0 = arith.constant 0 : i32
    return %arg0, %c0_i32 : i32, i32
  }
}

</mosaic_0001>

<llo_original>
// kernel: tpu_custom_call.1
$region0: #{tpu_custom_call.1}
  #allocation0 [shape = 'u32[]', space=smem, size = 0x4, offset = 0x4, fixed_abs, tag = 'smem constant byte address 0x4 - core index']
  #allocation1 [shape = 'u32[72,128]{1,0:T(1,128)}', space=vmem, size = 0x9000, scoped, tag = 'internal scratch']
  #allocation2 [shape = 'f32[1,128]{1,0:T(1,128)}', space=vmem, size = 0x200, scoped, tag = 'scratch operand']
  %s0 = inlined_call_operand.vmem [shape: f32[256,256], index: 0, kind: input, shape index: {}]
  %s1 = inlined_call_operand.hbm [shape: f32[256,256], index: 1, kind: input, shape index: {}]
  %s2 = inlined_call_operand.vmem [shape: f32[1,256], index: 2, kind: input, shape index: {}]
  %s3 = inlined_call_operand.vmem [shape: f32[1,256], index: 3, kind: input, shape index: {}]
  %s4 = inlined_call_operand.vmem [shape: f32[256,1], index: 4, kind: input, shape index: {}]
  %s5 = inlined_call_operand.vmem [shape: f32[256,1], index: 5, kind: input, shape index: {}]
  %s6 = inlined_call_operand.hbm [shape: f32[16,128], index: 6, kind: output, shape index: {}]
  %s7 = sld [smem:[#allocation0]]
  $region107: #{tpu_custom_call.1} parent=0
    _
  %s9 = ssub.s32 1, %s7
  %s10 = scalar_select 0, %s9, %s7
  $region1: #{tpu_custom_call.1} parent=0
    #allocation3 [shape = 'u8[131072]{0}', space=vmem, size = 0x20000, scoped, tag = 'input window, operand 0']
    #allocation4 [shape = 'u8[131072]{0}', space=vmem, size = 0x20000, scoped, tag = 'input window, operand 1']
    #allocation5 [shape = 's32[2]{0}', space=sflag, size = 0x8, scoped, tag = 'scoped memory for tpu_custom_call.1']
    #allocation6 [shape = 's32[2]{0}', space=sflag, size = 0x8, scoped, tag = 'scoped memory for tpu_custom_call.1']
    #allocation7 [shape = 'u8[8192]{0}', space=vmem, size = 0x2000, scoped, tag = 'output window, operand 0']
    %11 = vsyncpa [#allocation5], 0
    %s12 = scalar_lea.sflag [#allocation5], 1
    %13 = vsyncpa %s12, 0
    %14 = vsyncpa [#allocation6], 0
    %s15 = scalar_lea.sflag [#allocation6], 1
    %16 = vsyncpa %s15, 0
    loop: start=0, step=1, limit=6
    $region2: #{tpu_custom_call.1} parent=1 // loop_pre_header
      _
    $region3: #{tpu_custom_call.1} parent=1 // loop_header
      %s18 = sphi 0, %s22
      %p19 = scmp.ge.s32.totalorder %s18, 6
      %s25 = sphi 0, %s37
      %s26 = sphi 0, %s33
      %s27 = sphi 0, %s25
      %s28 = sphi 0, %s26
      %s29 = sphi 0, %s27
      %s30 = sphi 0, %s28
      %s42 = sphi 0, %s44
      %s45 = sphi 0, %s42
      %s46 = sphi 0, %s45
      %s62 = sphi 0, %s46
      %s70 = sphi 0, %s72
      %s73 = sphi 0, %s70
      %s74 = sphi 0, %s73
      %s90 = sphi 0, %s74
      %s96 = sphi 0, %s98
      %s99 = sphi 0, %s96
      %s100 = sphi 0, %s99
      %s116 = sphi 0, %s100
      %s122 = sphi 0, %s124
      %s125 = sphi 0, %s122
      %s126 = sphi 0, %s125
      %s142 = sphi 0, %s126
      %s148 = sphi 0, %s150
      %s151 = sphi 0, %s148
      %s152 = sphi 0, %s151
      %s168 = sphi 0, %s152
      %s174 = sphi 0, %s176
      %s177 = sphi 0, %s174
      %s178 = sphi 0, %s177
      %s194 = sphi 0, %s178
      %s200 = sphi 0, %s202
      %s203 = sphi 0, %s200
      %s204 = sphi 0, %s203
      %s220 = sphi 0, %s204
    $region4: #{tpu_custom_call.1} parent=1 // loop_header_branch
      %21 = sbr.rel (%p19) target = $region8
    $region5: #{tpu_custom_call.1} parent=1 // loop_body
      %s23 = ssub.s32 %s18, 1
      %s24 = ssub.s32 %s18, 2
      %s31 = sadd.s32 1, %s26
      %p32 = scmp.ge.s32.totalorder %s31, 2
      %s33 = scalar_select %p32, 0, %s31
      %s34 = sadd.s32 1, %s25
      %s35 = scalar_select %p32, %s34, %s25
      %p36 = scmp.ge.s32.totalorder %s35, 2
      %s37 = scalar_select %p36, 0, %s35
      %s38 = ssub.s32 %s25, %s37
      %s39 = ssub.s32 %s26, %s33
      %s40 = sor.u32 %s38, %s39
      %p41 = scmp.eq.s32.totalorder %s40, 0
      %s43 = sadd.s32 %s42, 1
      %s44 = scalar_select %p41, %s42, %s43
      %p47 = pneg %p41
      %p48 = scmp.eq.s32.totalorder %s18, 3
      %p49 = por %p47, %p48
      %p50 = scmp.ne.s32.totalorder %s42, %s45
      %p51 = scmp.eq.s32.totalorder %s18, 0
      %p52 = por %p50, %p51
      %p53 = scmp.ne.s32.totalorder %s42, %s45
      %p54 = scmp.eq.s32.totalorder %s23, 3
      %p55 = por %p53, %p54
      %p56 = scmp.ne.s32.totalorder %s45, %s46
      %p57 = scmp.eq.s32.totalorder %s23, 0
      %p58 = por %p56, %p57
      %p59 = scmp.ne.s32.totalorder %s45, %s46
      %p60 = scmp.eq.s32.totalorder %s24, 3
      %p61 = por %p59, %p60
      %p63 = scmp.ne.s32.totalorder %s46, %s62
      %p64 = scmp.eq.s32.totalorder %s24, 0
      %p65 = por %p63, %p64
      %s66 = ssub.s32 %s25, %s37
      %s67 = ssub.s32 %s26, %s33
      %s68 = sor.u32 %s66, %s67
      %p69 = scmp.eq.s32.totalorder %s68, 0
      %s71 = sadd.s32 %s70, 1
      %s72 = scalar_select %p69, %s70, %s71
      %p75 = pneg %p69
      %p76 = scmp.eq.s32.totalorder %s18, 3
      %p77 = por %p75, %p76
      %p78 = scmp.ne.s32.totalorder %s70, %s73
      %p79 = scmp.eq.s32.totalorder %s18, 0
      %p80 = por %p78, %p79
      %p81 = scmp.ne.s32.totalorder %s70, %s73
      %p82 = scmp.eq.s32.totalorder %s23, 3
      %p83 = por %p81, %p82
      %p84 = scmp.ne.s32.totalorder %s73, %s74
      %p85 = scmp.eq.s32.totalorder %s23, 0
      %p86 = por %p84, %p85
      %p87 = scmp.ne.s32.totalorder %s73, %s74
      %p88 = scmp.eq.s32.totalorder %s24, 3
      %p89 = por %p87, %p88
      %p91 = scmp.ne.s32.totalorder %s74, %s90
      %p92 = scmp.eq.s32.totalorder %s24, 0
      %p93 = por %p91, %p92
      %s94 = ssub.s32 %s26, %s33
      %p95 = scmp.eq.s32.totalorder %s94, 0
      %s97 = sadd.s32 %s96, 1
      %s98 = scalar_select %p95, %s96, %s97
      %p101 = pneg %p95
      %p102 = scmp.eq.s32.totalorder %s18, 3
      %p103 = por %p101, %p102
      %p104 = scmp.ne.s32.totalorder %s96, %s99
      %p105 = scmp.eq.s32.totalorder %s18, 0
      %p106 = por %p104, %p105
      %p107 = scmp.ne.s32.totalorder %s96, %s99
      %p108 = scmp.eq.s32.totalorder %s23, 3
      %p109 = por %p107, %p108
      %p110 = scmp.ne.s32.totalorder %s99, %s100
      %p111 = scmp.eq.s32.totalorder %s23, 0
      %p112 = por %p110, %p111
      %p113 = scmp.ne.s32.totalorder %s99, %s100
      %p114 = scmp.eq.s32.totalorder %s24, 3
      %p115 = por %p113, %p114
      %p117 = scmp.ne.s32.totalorder %s100, %s116
      %p118 = scmp.eq.s32.totalorder %s24, 0
      %p119 = por %p117, %p118
      %s120 = ssub.s32 %s26, %s33
      %p121 = scmp.eq.s32.totalorder %s120, 0
      %s123 = sadd.s32 %s122, 1
      %s124 = scalar_select %p121, %s122, %s123
      %p127 = pneg %p121
      %p128 = scmp.eq.s32.totalorder %s18, 3
      %p129 = por %p127, %p128
      %p130 = scmp.ne.s32.totalorder %s122, %s125
      %p131 = scmp.eq.s32.totalorder %s18, 0
      %p132 = por %p130, %p131
      %p133 = scmp.ne.s32.totalorder %s122, %s125
      %p134 = scmp.eq.s32.totalorder %s23, 3
      %p135 = por %p133, %p134
      %p136 = scmp.ne.s32.totalorder %s125, %s126
      %p137 = scmp.eq.s32.totalorder %s23, 0
      %p138 = por %p136, %p137
      %p139 = scmp.ne.s32.totalorder %s125, %s126
      %p140 = scmp.eq.s32.totalorder %s24, 3
      %p141 = por %p139, %p140
      %p143 = scmp.ne.s32.totalorder %s126, %s142
      %p144 = scmp.eq.s32.totalorder %s24, 0
      %p145 = por %p143, %p144
      %s146 = ssub.s32 %s25, %s37
      %p147 = scmp.eq.s32.totalorder %s146, 0
      %s149 = sadd.s32 %s148, 1
      %s150 = scalar_select %p147, %s148, %s149
      %p153 = pneg %p147
      %p154 = scmp.eq.s32.totalorder %s18, 3
      %p155 = por %p153, %p154
      %p156 = scmp.ne.s32.totalorder %s148, %s151
      %p157 = scmp.eq.s32.totalorder %s18, 0
      %p158 = por %p156, %p157
      %p159 = scmp.ne.s32.totalorder %s148, %s151
      %p160 = scmp.eq.s32.totalorder %s23, 3
      %p161 = por %p159, %p160
      %p162 = scmp.ne.s32.totalorder %s151, %s152
      %p163 = scmp.eq.s32.totalorder %s23, 0
      %p164 = por %p162, %p163
      %p165 = scmp.ne.s32.totalorder %s151, %s152
      %p166 = scmp.eq.s32.totalorder %s24, 3
      %p167 = por %p165, %p166
      %p169 = scmp.ne.s32.totalorder %s152, %s168
      %p170 = scmp.eq.s32.totalorder %s24, 0
      %p171 = por %p169, %p170
      %s172 = ssub.s32 %s25, %s37
      %p173 = scmp.eq.s32.totalorder %s172, 0
      %s175 = sadd.s32 %s174, 1
      %s176 = scalar_select %p173, %s174, %s175
      %p179 = pneg %p173
      %p180 = scmp.eq.s32.totalorder %s18, 3
      %p181 = por %p179, %p180
      %p182 = scmp.ne.s32.totalorder %s174, %s177
      %p183 = scmp.eq.s32.totalorder %s18, 0
      %p184 = por %p182, %p183
      %p185 = scmp.ne.s32.totalorder %s174, %s177
      %p186 = scmp.eq.s32.totalorder %s23, 3
      %p187 = por %p185, %p186
      %p188 = scmp.ne.s32.totalorder %s177, %s178
      %p189 = scmp.eq.s32.totalorder %s23, 0
      %p190 = por %p188, %p189
      %p191 = scmp.ne.s32.totalorder %s177, %s178
      %p192 = scmp.eq.s32.totalorder %s24, 3
      %p193 = por %p191, %p192
      %p195 = scmp.ne.s32.totalorder %s178, %s194
      %p196 = scmp.eq.s32.totalorder %s24, 0
      %p197 = por %p195, %p196
      %s198 = ssub.s32 %s25, %s37
      %p199 = scmp.eq.s32.totalorder %s198, 0
      %s201 = sadd.s32 %s200, 1
      %s202 = scalar_select %p199, %s200, %s201
      %p205 = pneg %p199
      %p206 = scmp.eq.s32.totalorder %s18, 3
      %p207 = por %p205, %p206
      %p208 = scmp.ne.s32.totalorder %s200, %s203
      %p209 = scmp.eq.s32.totalorder %s18, 0
      %p210 = por %p208, %p209
      %p211 = scmp.ne.s32.totalorder %s200, %s203
      %p212 = scmp.eq.s32.totalorder %s23, 3
      %p213 = por %p211, %p212
      %p214 = scmp.ne.s32.totalorder %s203, %s204
      %p215 = scmp.eq.s32.totalorder %s23, 0
      %p216 = por %p214, %p215
      %p217 = scmp.ne.s32.totalorder %s203, %s204
      %p218 = scmp.eq.s32.totalorder %s24, 3
      %p219 = por %p217, %p218
      %p221 = scmp.ne.s32.totalorder %s204, %s220
      %p222 = scmp.eq.s32.totalorder %s24, 0
      %p223 = por %p221, %p222
      %p224 = scmp.le.s32.totalorder 1, %s18
      %p225 = scmp.lt.s32.totalorder %s18, 5
      %p226 = pnand %p224, %p225
      %p227 = pneg %p226
      // Predicated region
      $region9: #{tpu_custom_call.1} parent=5 // pred_check
        _
      $region10: #{tpu_custom_call.1} parent=5 // pred_check_branch
        %229 = sbr.rel (%p226) target = $region12
      $region11: #{tpu_custom_call.1} parent=5 // pred_region
        %s230 = ssub.s32 %s18, 1
      $region12: #{tpu_custom_call.1} parent=5 // pred_fallthru
        _
      %p231 = scmp.lt.s32.totalorder %s18, 4
      // Predicated region
      $region13: #{tpu_custom_call.1} parent=5 // pred_check
        %p232 = pneg %p231
      $region14: #{tpu_custom_call.1} parent=5 // pred_check_branch
        %234 = sbr.rel (%p232) target = $region16
      $region15: #{tpu_custom_call.1} parent=5 // pred_region
        // Predicated region
        $region17: #{tpu_custom_call.1} parent=15 // pred_check
          %p235 = pneg %p52
        $region18: #{tpu_custom_call.1} parent=15 // pred_check_branch
          %237 = sbr.rel (%p235) target = $region20
        $region19: #{tpu_custom_call.1} parent=15 // pred_region
          %s238 = sand.u32 %s42, 1
          %s239 = sand.u32 %s42, 1
          %s240 = smul.addr %s239, 128
          %s241 = scalar_lea.vmem [#allocation3], %s240
          %s242 = smul.u32 16, %s25
          %s243 = smul.addr %s242, 2
          %s244 = sadd.s32 %s26, %s243
          %s245 = smul.addr %s244, 8
          %s246 = scalar_lea.vmem %s0, %s245
          // Predicated region
          $region21: #{tpu_custom_call.1} parent=19 // pred_check
            _
          $region22: #{tpu_custom_call.1} parent=19 // pred_check_branch
            %248 = sbr.rel (0) target = $region24
          $region23: #{tpu_custom_call.1} parent=19 // pred_region
            // Predicated region
            $region25: #{tpu_custom_call.1} parent=23 // pred_check
              _
            $region26: #{tpu_custom_call.1} parent=23 // pred_check_branch
              %250 = sbr.rel (0) target = $region28
            $region27: #{tpu_custom_call.1} parent=23 // pred_region
              // Predicated region
              $region40: #{tpu_custom_call.1} parent=27 // pred_check
                _
              $region41: #{tpu_custom_call.1} parent=27 // pred_check_branch
                %296 = sbr.rel (0) target = $region43
              $region42: #{tpu_custom_call.1} parent=27 // pred_region
                loop: start=0, step=1, limit=1
                $region44: #{tpu_custom_call.1} parent=42 // loop_pre_header
                  _
                $region45: #{tpu_custom_call.1} parent=42 // loop_header
                  %s298 = sphi 0, %s302
                  %p299 = scmp.ge.s32.totalorder %s298, 1
                  %s303 = sphi %s246, %s246
                  %s304 = sphi %s241, %s241
                $region46: #{tpu_custom_call.1} parent=42 // loop_header_branch
                  %301 = sbr.rel (%p299) target = $region50
                $region47: #{tpu_custom_call.1} parent=42 // loop_body
                  %v305 = vld [vmem:[%s303] sm:$0xff]
                  %306 = vst [vmem:[%s304] sm:$0xff] %v305
                  %v307 = vld [vmem:[%s303 + $0x10] sm:$0xff]
                  %308 = vst [vmem:[%s304 + $0x8] sm:$0xff] %v307
                  %v309 = vld [vmem:[%s303 + $0x20] sm:$0xff]
                  %310 = vst [vmem:[%s304 + $0x10] sm:$0xff] %v309
                  %v311 = vld [vmem:[%s303 + $0x30] sm:$0xff]
                  %312 = vst [vmem:[%s304 + $0x18] sm:$0xff] %v311
                  %v313 = vld [vmem:[%s303 + $0x40] sm:$0xff]
                  %314 = vst [vmem:[%s304 + $0x20] sm:$0xff] %v313
                  %v315 = vld [vmem:[%s303 + $0x50] sm:$0xff]
                  %316 = vst [vmem:[%s304 + $0x28] sm:$0xff] %v315
                  %v317 = vld [vmem:[%s303 + $0x60] sm:$0xff]
                  %318 = vst [vmem:[%s304 + $0x30] sm:$0xff] %v317
                  %v319 = vld [vmem:[%s303 + $0x70] sm:$0xff]
                  %320 = vst [vmem:[%s304 + $0x38] sm:$0xff] %v319
                  %v321 = vld [vmem:[%s303 + $0x80] sm:$0xff]
                  %322 = vst [vmem:[%s304 + $0x40] sm:$0xff] %v321
                  %v323 = vld [vmem:[%s303 + $0x90] sm:$0xff]
                  %324 = vst [vmem:[%s304 + $0x48] sm:$0xff] %v323
                  %v325 = vld [vmem:[%s303 + $0xa0] sm:$0xff]
                  %326 = vst [vmem:[%s304 + $0x50] sm:$0xff] %v325
                  %v327 = vld [vmem:[%s303 + $0xb0] sm:$0xff]
                  %328 = vst [vmem:[%s304 + $0x58] sm:$0xff] %v327
                  %v329 = vld [vmem:[%s303 + $0xc0] sm:$0xff]
                  %330 = vst [vmem:[%s304 + $0x60] sm:$0xff] %v329
                  %v331 = vld [vmem:[%s303 + $0xd0] sm:$0xff]
                  %332 = vst [vmem:[%s304 + $0x68] sm:$0xff] %v331
                  %v333 = vld [vmem:[%s303 + $0xe0] sm:$0xff]
                  %334 = vst [vmem:[%s304 + $0x70] sm:$0xff] %v333
                  %v335 = vld [vmem:[%s303 + $0xf0] sm:$0xff]
                  %336 = vst [vmem:[%s304 + $0x78] sm:$0xff] %v335
                $region48: #{tpu_custom_call.1} parent=42 // loop_footer
                  %s302 = sadd.s32 1, %s298
                $region49: #{tpu_custom_call.1} parent=42 // loop_footer_branch
                  %297 = sbr.rel target = $region45
                $region50: #{tpu_custom_call.1} parent=42 // loop_exit
                  _
              $region43: #{tpu_custom_call.1} parent=27 // pred_fallthru
                _
              // Predicated region
              $region51: #{tpu_custom_call.1} parent=27 // pred_check
                _
              $region52: #{tpu_custom_call.1} parent=27 // pred_check_branch
                %338 = sbr.rel target = $region54
              $region53: #{tpu_custom_call.1} parent=27 // pred_region
                _
              $region54: #{tpu_custom_call.1} parent=27 // pred_fallthru
                _
            $region28: #{tpu_custom_call.1} parent=23 // pred_fallthru
              _
            // Predicated region
            $region29: #{tpu_custom_call.1} parent=23 // pred_check
              _
            $region30: #{tpu_custom_call.1} parent=23 // pred_check_branch
              %252 = sbr.rel target = $region32
            $region31: #{tpu_custom_call.1} parent=23 // pred_region
              %s254 = ssub.s32 256, 1
              loop: start=0, step=1, limit=1
              $region33: #{tpu_custom_call.1} parent=31 // loop_pre_header
                _
              $region34: #{tpu_custom_call.1} parent=31 // loop_header
                %s256 = sphi 0, %s260
                %p257 = scmp.ge.s32.totalorder %s256, 1
                %s261 = sphi %s246, %s246
                %s262 = sphi %s241, %s241
              $region35: #{tpu_custom_call.1} parent=31 // loop_header_branch
                %259 = sbr.rel (%p257) target = $region39
              $region36: #{tpu_custom_call.1} parent=31 // loop_body
                %v263 = vld [vmem:[%s261] sm:%s254]
                %264 = vst [vmem:[%s262] sm:%s254] %v263
                %v265 = vld [vmem:[%s261 + $0x10] sm:%s254]
                %266 = vst [vmem:[%s262 + $0x8] sm:%s254] %v265
                %v267 = vld [vmem:[%s261 + $0x20] sm:%s254]
                %268 = vst [vmem:[%s262 + $0x10] sm:%s254] %v267
                %v269 = vld [vmem:[%s261 + $0x30] sm:%s254]
                %270 = vst [vmem:[%s262 + $0x18] sm:%s254] %v269
                %v271 = vld [vmem:[%s261 + $0x40] sm:%s254]
                %272 = vst [vmem:[%s262 + $0x20] sm:%s254] %v271
                %v273 = vld [vmem:[%s261 + $0x50] sm:%s254]
                %274 = vst [vmem:[%s262 + $0x28] sm:%s254] %v273
                %v275 = vld [vmem:[%s261 + $0x60] sm:%s254]
                %276 = vst [vmem:[%s262 + $0x30] sm:%s254] %v275
                %v277 = vld [vmem:[%s261 + $0x70] sm:%s254]
                %278 = vst [vmem:[%s262 + $0x38] sm:%s254] %v277
                %v279 = vld [vmem:[%s261 + $0x80] sm:%s254]
                %280 = vst [vmem:[%s262 + $0x40] sm:%s254] %v279
                %v281 = vld [vmem:[%s261 + $0x90] sm:%s254]
                %282 = vst [vmem:[%s262 + $0x48] sm:%s254] %v281
                %v283 = vld [vmem:[%s261 + $0xa0] sm:%s254]
                %284 = vst [vmem:[%s262 + $0x50] sm:%s254] %v283
                %v285 = vld [vmem:[%s261 + $0xb0] sm:%s254]
                %286 = vst [vmem:[%s262 + $0x58] sm:%s254] %v285
                %v287 = vld [vmem:[%s261 + $0xc0] sm:%s254]
                %288 = vst [vmem:[%s262 + $0x60] sm:%s254] %v287
                %v289 = vld [vmem:[%s261 + $0xd0] sm:%s254]
                %290 = vst [vmem:[%s262 + $0x68] sm:%s254] %v289
                %v291 = vld [vmem:[%s261 + $0xe0] sm:%s254]
                %292 = vst [vmem:[%s262 + $0x70] sm:%s254] %v291
                %v293 = vld [vmem:[%s261 + $0xf0] sm:%s254]
                %294 = vst [vmem:[%s262 + $0x78] sm:%s254] %v293
              $region37: #{tpu_custom_call.1} parent=31 // loop_footer
                %s260 = sadd.s32 1, %s256
              $region38: #{tpu_custom_call.1} parent=31 // loop_footer_branch
                %255 = sbr.rel target = $region34
              $region39: #{tpu_custom_call.1} parent=31 // loop_exit
                _
            $region32: #{tpu_custom_call.1} parent=23 // pred_fallthru
              _
          $region24: #{tpu_custom_call.1} parent=19 // pred_fallthru
            _
          %339 = vnop
        $region20: #{tpu_custom_call.1} parent=15 // pred_fallthru
          _
        // Predicated region
        $region55: #{tpu_custom_call.1} parent=15 // pred_check
          %p340 = pneg %p80
        $region56: #{tpu_custom_call.1} parent=15 // pred_check_branch
          %342 = sbr.rel (%p340) target = $region58
        $region57: #{tpu_custom_call.1} parent=15 // pred_region
          %s343 = sand.u32 %s70, 1
          %s344 = scalar_lea.sflag [#allocation5], %s343
          %s345 = sand.u32 %s70, 1
          %s346 = smul.addr %s345, 128
          %s347 = scalar_lea.vmem [#allocation4], %s346
          %s348 = smul.u32 16, %s25
          %350 = vsyncadd %s344, 0
          %s351 = smul.addr %s348, 2
          %s352 = sadd.s32 %s26, %s351
          %s353 = smul.addr %s352, 8
          %s354 = scalar_lea.hbm %s1, %s353
          %s355 = sshll.u32 %s354, 4
          %s356 = int_to_ptr.hbm [resolvable:$true] %s355
          %s357 = sshll.u32 %s347, 4
          %s358 = int_to_ptr.vmem [resolvable:$true] %s357
          %363 = dma.hbm_to_vmem [thread:$0]  %s356, 2048, %s358, %s344, 256, 128, 8
        $region58: #{tpu_custom_call.1} parent=15 // pred_fallthru
          _
        // Predicated region
        $region59: #{tpu_custom_call.1} parent=15 // pred_check
          %p364 = pneg %p106
        $region60: #{tpu_custom_call.1} parent=15 // pred_check_branch
          %366 = sbr.rel (%p364) target = $region62
        $region61: #{tpu_custom_call.1} parent=15 // pred_region
          %p367 = scmp.lt.s32.totalorder %s26, 1
          %s368 = scalar_select %p367, %s26, 1
          %s369 = scalar_lea.vmem %s2, %s368
        $region62: #{tpu_custom_call.1} parent=15 // pred_fallthru
          _
        // Predicated region
        $region63: #{tpu_custom_call.1} parent=15 // pred_check
          %p370 = pneg %p132
        $region64: #{tpu_custom_call.1} parent=15 // pred_check_branch
          %372 = sbr.rel (%p370) target = $region66
        $region65: #{tpu_custom_call.1} parent=15 // pred_region
          %p373 = scmp.lt.s32.totalorder %s26, 1
          %s374 = scalar_select %p373, %s26, 1
          %s375 = scalar_lea.vmem %s3, %s374
        $region66: #{tpu_custom_call.1} parent=15 // pred_fallthru
          _
        // Predicated region
        $region67: #{tpu_custom_call.1} parent=15 // pred_check
          %p376 = pneg %p158
        $region68: #{tpu_custom_call.1} parent=15 // pred_check_branch
          %378 = sbr.rel (%p376) target = $region70
        $region69: #{tpu_custom_call.1} parent=15 // pred_region
          %s379 = smul.u32 16, %s25
          %p380 = scmp.lt.s32.totalorder %s379, 31
          %s381 = scalar_select %p380, %s379, 31
          %s382 = smul.addr %s381, 8
          %s383 = scalar_lea.vmem %s4, %s382
          %s384 = smul.u32 16, %s25
        $region70: #{tpu_custom_call.1} parent=15 // pred_fallthru
          _
        // Predicated region
        $region71: #{tpu_custom_call.1} parent=15 // pred_check
          %p385 = pneg %p184
        $region72: #{tpu_custom_call.1} parent=15 // pred_check_branch
          %387 = sbr.rel (%p385) target = $region74
        $region73: #{tpu_custom_call.1} parent=15 // pred_region
          %s388 = smul.u32 16, %s25
          %p389 = scmp.lt.s32.totalorder %s388, 31
          %s390 = scalar_select %p389, %s388, 31
          %s391 = smul.addr %s390, 8
          %s392 = scalar_lea.vmem %s5, %s391
          %s393 = smul.u32 16, %s25
        $region74: #{tpu_custom_call.1} parent=15 // pred_fallthru
          _
      $region16: #{tpu_custom_call.1} parent=5 // pred_fallthru
        _
      %p394 = scmp.le.s32.totalorder 1, %s18
      %p395 = scmp.lt.s32.totalorder %s18, 5
      %p396 = pnand %p394, %p395
      %p397 = pneg %p396
      // Predicated region
      $region75: #{tpu_custom_call.1} parent=5 // pred_check
        _
      $region76: #{tpu_custom_call.1} parent=5 // pred_check_branch
        %399 = sbr.rel (%p396) target = $region78
      $region77: #{tpu_custom_call.1} parent=5 // pred_region
        %s400 = ssub.s32 %s18, 1
        %s401 = sand.u32 %s45, 1
        %s402 = sand.u32 %s45, 1
        %s403 = smul.addr %s402, 128
        %s404 = scalar_lea.vmem [#allocation3], %s403
        // Predicated region
        $region79: #{tpu_custom_call.1} parent=77 // pred_check
          %p405 = pneg %p58
        $region80: #{tpu_custom_call.1} parent=77 // pred_check_branch
          %407 = sbr.rel (%p405) target = $region82
        $region81: #{tpu_custom_call.1} parent=77 // pred_region
          _
        $region82: #{tpu_custom_call.1} parent=77 // pred_fallthru
          _
        %s408 = sand.u32 %s73, 1
        %s409 = scalar_lea.sflag [#allocation5], %s408
        %s410 = sand.u32 %s73, 1
        %s411 = smul.addr %s410, 128
        %s412 = scalar_lea.vmem [#allocation4], %s411
        // Predicated region
        $region83: #{tpu_custom_call.1} parent=77 // pred_check
          %p413 = pneg %p86
        $region84: #{tpu_custom_call.1} parent=77 // pred_check_branch
          %415 = sbr.rel (%p413) target = $region86
        $region85: #{tpu_custom_call.1} parent=77 // pred_region
          %417 = dma.done %s409, 2048
        $region86: #{tpu_custom_call.1} parent=77 // pred_fallthru
          _
        %s418 = sand.u32 %s45, 1
        %s419 = sand.u32 %s45, 1
        %s420 = smul.addr %s419, 128
        %s421 = scalar_lea.vmem [#allocation3], %s420
        %p422 = pneg %p58
        %p423 = pneg %p55
        %s424 = sand.u32 %s73, 1
        %s425 = scalar_lea.sflag [#allocation5], %s424
        %s426 = sand.u32 %s73, 1
        %s427 = smul.addr %s426, 128
        %s428 = scalar_lea.vmem [#allocation4], %s427
        %p429 = pneg %p86
        %p430 = pneg %p83
        %p431 = scmp.lt.s32.totalorder %s28, 1
        %s432 = scalar_select %p431, %s28, 1
        %s433 = scalar_lea.vmem %s2, %s432
        %p434 = pneg %p112
        %p435 = pneg %p109
        %p436 = scmp.lt.s32.totalorder %s28, 1
        %s437 = scalar_select %p436, %s28, 1
        %s438 = scalar_lea.vmem %s3, %s437
        %p439 = pneg %p138
        %p440 = pneg %p135
        %s441 = smul.u32 16, %s27
        %p442 = scmp.lt.s32.totalorder %s441, 31
        %s443 = scalar_select %p442, %s441, 31
        %s444 = smul.addr %s443, 8
        %s445 = scalar_lea.vmem %s4, %s444
        %p446 = pneg %p164
        %p447 = pneg %p161
        %s448 = smul.u32 16, %s27
        %p449 = scmp.lt.s32.totalorder %s448, 31
        %s450 = scalar_select %p449, %s448, 31
        %s451 = smul.addr %s450, 8
        %s452 = scalar_lea.vmem %s5, %s451
        %p453 = pneg %p190
        %p454 = pneg %p187
        %p455 = pneg %p216
        %p456 = pneg %p213
        %s457 = sand.u32 %s203, 1
        %s458 = scalar_lea.sflag [#allocation6], %s457
        %s459 = sand.u32 %s203, 1
        %s460 = smul.addr %s459, 8
        %s461 = scalar_lea.vmem [#allocation7], %s460
        %s462 = smul.u32 16, %s27
        %s463 = smul.u32 16, %s27
        %p464 = scmp.lt.s32.totalorder %s28, 1
        %s465 = scalar_select %p464, %s28, 1
        %s466 = scalar_lea.vmem %s2, %s465
        %p467 = scmp.lt.s32.totalorder %s28, 1
        %s468 = scalar_select %p467, %s28, 1
        %s469 = scalar_lea.vmem %s3, %s468
        %s470 = smul.u32 16, %s27
        %p471 = scmp.lt.s32.totalorder %s470, 31
        %s472 = scalar_select %p471, %s470, 31
        %s473 = smul.addr %s472, 8
        %s474 = scalar_lea.vmem %s4, %s473
        %s475 = smul.u32 16, %s27
        %s476 = smul.u32 16, %s27
        %p477 = scmp.lt.s32.totalorder %s476, 31
        %s478 = scalar_select %p477, %s476, 31
        %s479 = smul.addr %s478, 8
        %s480 = scalar_lea.vmem %s5, %s479
        %s481 = smul.u32 16, %s27
        %p482 = scmp.eq.s32.totalorder %s28, 0
        // Predicated region
        $region87: #{tpu_custom_call.1} parent=77 // pred_check
          %p483 = pneg %p482
        $region88: #{tpu_custom_call.1} parent=77 // pred_check_branch
          %485 = sbr.rel (%p483) target = $region90
        $region89: #{tpu_custom_call.1} parent=77 // pred_region
          %486 = vst [vmem:[#allocation2] sm:$0x1] 0.0
        $region90: #{tpu_custom_call.1} parent=77 // pred_fallthru
          _
        %v487 = vld [vmem:[%s404] sm:$0xff]
        %v488 = vld [vmem:[%s404 + $0x8] sm:$0xff]
        %v489 = vld [vmem:[%s404 + $0x10] sm:$0xff]
        %v490 = vld [vmem:[%s404 + $0x18] sm:$0xff]
        %v491 = vld [vmem:[%s404 + $0x20] sm:$0xff]
        %v492 = vld [vmem:[%s404 + $0x28] sm:$0xff]
        %v493 = vld [vmem:[%s404 + $0x30] sm:$0xff]
        %v494 = vld [vmem:[%s404 + $0x38] sm:$0xff]
        %v495 = vld [vmem:[%s404 + $0x40] sm:$0xff]
        %v496 = vld [vmem:[%s404 + $0x48] sm:$0xff]
        %v497 = vld [vmem:[%s404 + $0x50] sm:$0xff]
        %v498 = vld [vmem:[%s404 + $0x58] sm:$0xff]
        %v499 = vld [vmem:[%s404 + $0x60] sm:$0xff]
        %v500 = vld [vmem:[%s404 + $0x68] sm:$0xff]
        %v501 = vld [vmem:[%s404 + $0x70] sm:$0xff]
        %v502 = vld [vmem:[%s404 + $0x78] sm:$0xff]
        %v503 = vld [vmem:[%s412] sm:$0xff]
        %v504 = vld [vmem:[%s412 + $0x8] sm:$0xff]
        %v505 = vld [vmem:[%s412 + $0x10] sm:$0xff]
        %v506 = vld [vmem:[%s412 + $0x18] sm:$0xff]
        %v507 = vld [vmem:[%s412 + $0x20] sm:$0xff]
        %v508 = vld [vmem:[%s412 + $0x28] sm:$0xff]
        %v509 = vld [vmem:[%s412 + $0x30] sm:$0xff]
        %v510 = vld [vmem:[%s412 + $0x38] sm:$0xff]
        %v511 = vld [vmem:[%s412 + $0x40] sm:$0xff]
        %v512 = vld [vmem:[%s412 + $0x48] sm:$0xff]
        %v513 = vld [vmem:[%s412 + $0x50] sm:$0xff]
        %v514 = vld [vmem:[%s412 + $0x58] sm:$0xff]
        %v515 = vld [vmem:[%s412 + $0x60] sm:$0xff]
        %v516 = vld [vmem:[%s412 + $0x68] sm:$0xff]
        %v517 = vld [vmem:[%s412 + $0x70] sm:$0xff]
        %v518 = vld [vmem:[%s412 + $0x78] sm:$0xff]
        %v519 = vld [vmem:[%s466] sm:$0x1]
        %v520 = vld [vmem:[%s469] sm:$0x1]
        %v521 = vld [vmem:[%s474] sm:$0xff]
        %v522 = vld [vmem:[%s474 + $0x8] sm:$0xff]
        %v523 = vld [vmem:[%s474 + $0x10] sm:$0xff]
        %v524 = vld [vmem:[%s474 + $0x18] sm:$0xff]
        %v525 = vld [vmem:[%s474 + $0x20] sm:$0xff]
        %v526 = vld [vmem:[%s474 + $0x28] sm:$0xff]
        %v527 = vld [vmem:[%s474 + $0x30] sm:$0xff]
        %v528 = vld [vmem:[%s474 + $0x38] sm:$0xff]
        %v529 = vld [vmem:[%s474 + $0x40] sm:$0xff]
        %v530 = vld [vmem:[%s474 + $0x48] sm:$0xff]
        %v531 = vld [vmem:[%s474 + $0x50] sm:$0xff]
        %v532 = vld [vmem:[%s474 + $0x58] sm:$0xff]
        %v533 = vld [vmem:[%s474 + $0x60] sm:$0xff]
        %v534 = vld [vmem:[%s474 + $0x68] sm:$0xff]
        %v535 = vld [vmem:[%s474 + $0x70] sm:$0xff]
        %v536 = vld [vmem:[%s474 + $0x78] sm:$0xff]
        %v537 = vld [vmem:[%s480] sm:$0xff]
        %v538 = vld [vmem:[%s480 + $0x8] sm:$0xff]
        %v539 = vld [vmem:[%s480 + $0x10] sm:$0xff]
        %v540 = vld [vmem:[%s480 + $0x18] sm:$0xff]
        %v541 = vld [vmem:[%s480 + $0x20] sm:$0xff]
        %v542 = vld [vmem:[%s480 + $0x28] sm:$0xff]
        %v543 = vld [vmem:[%s480 + $0x30] sm:$0xff]
        %v544 = vld [vmem:[%s480 + $0x38] sm:$0xff]
        %v545 = vld [vmem:[%s480 + $0x40] sm:$0xff]
        %v546 = vld [vmem:[%s480 + $0x48] sm:$0xff]
        %v547 = vld [vmem:[%s480 + $0x50] sm:$0xff]
        %v548 = vld [vmem:[%s480 + $0x58] sm:$0xff]
        %v549 = vld [vmem:[%s480 + $0x60] sm:$0xff]
        %v550 = vld [vmem:[%s480 + $0x68] sm:$0xff]
        %v551 = vld [vmem:[%s480 + $0x70] sm:$0xff]
        %v552 = vld [vmem:[%s480 + $0x78] sm:$0xff]
        %v553 = vmul.f32 %v519, 2.0
        %v554 = vsub.f32 1.0, %v553
        %v555 = vmul.f32 %v521, 2.0
        %v556 = vmul.f32 %v522, 2.0
        %v557 = vmul.f32 %v523, 2.0
        %v558 = vmul.f32 %v524, 2.0
        %v559 = vmul.f32 %v525, 2.0
        %v560 = vmul.f32 %v526, 2.0
        %v561 = vmul.f32 %v527, 2.0
        %v562 = vmul.f32 %v528, 2.0
        %v563 = vmul.f32 %v529, 2.0
        %v564 = vmul.f32 %v530, 2.0
        %v565 = vmul.f32 %v531, 2.0
        %v566 = vmul.f32 %v532, 2.0
        %v567 = vmul.f32 %v533, 2.0
        %v568 = vmul.f32 %v534, 2.0
        %v569 = vmul.f32 %v535, 2.0
        %v570 = vmul.f32 %v536, 2.0
        %v571 = vsub.f32 1.0, %v555
        %v572 = vsub.f32 1.0, %v556
        %v573 = vsub.f32 1.0, %v557
        %v574 = vsub.f32 1.0, %v558
        %v575 = vsub.f32 1.0, %v559
        %v576 = vsub.f32 1.0, %v560
        %v577 = vsub.f32 1.0, %v561
        %v578 = vsub.f32 1.0, %v562
        %v579 = vsub.f32 1.0, %v563
        %v580 = vsub.f32 1.0, %v564
        %v581 = vsub.f32 1.0, %v565
        %v582 = vsub.f32 1.0, %v566
        %v583 = vsub.f32 1.0, %v567
        %v584 = vsub.f32 1.0, %v568
        %v585 = vsub.f32 1.0, %v569
        %v586 = vsub.f32 1.0, %v570
        %588 = vset.pattern.permute.xlu0 0
        %589 = vperm.xlu0 %588, %v571
        %v590 = vpop.permute.xlu0 %589
        %593 = vset.pattern.permute.xlu0 0
        %594 = vperm.xlu0 %593, %v572
        %v595 = vpop.permute.xlu0 %594
        %598 = vset.pattern.permute.xlu0 0
        %599 = vperm.xlu0 %598, %v573
        %v600 = vpop.permute.xlu0 %599
        %603 = vset.pattern.permute.xlu0 0
        %604 = vperm.xlu0 %603, %v574
        %v605 = vpop.permute.xlu0 %604
        %608 = vset.pattern.permute.xlu0 0
        %609 = vperm.xlu0 %608, %v575
        %v610 = vpop.permute.xlu0 %609
        %613 = vset.pattern.permute.xlu0 0
        %614 = vperm.xlu0 %613, %v576
        %v615 = vpop.permute.xlu0 %614
        %618 = vset.pattern.permute.xlu0 0
        %619 = vperm.xlu0 %618, %v577
        %v620 = vpop.permute.xlu0 %619
        %623 = vset.pattern.permute.xlu0 0
        %624 = vperm.xlu0 %623, %v578
        %v625 = vpop.permute.xlu0 %624
        %628 = vset.pattern.permute.xlu0 0
        %629 = vperm.xlu0 %628, %v579
        %v630 = vpop.permute.xlu0 %629
        %633 = vset.pattern.permute.xlu0 0
        %634 = vperm.xlu0 %633, %v580
        %v635 = vpop.permute.xlu0 %634
        %638 = vset.pattern.permute.xlu0 0
        %639 = vperm.xlu0 %638, %v581
        %v640 = vpop.permute.xlu0 %639
        %643 = vset.pattern.permute.xlu0 0
        %644 = vperm.xlu0 %643, %v582
        %v645 = vpop.permute.xlu0 %644
        %648 = vset.pattern.permute.xlu0 0
        %649 = vperm.xlu0 %648, %v583
        %v650 = vpop.permute.xlu0 %649
        %653 = vset.pattern.permute.xlu0 0
        %654 = vperm.xlu0 %653, %v584
        %v655 = vpop.permute.xlu0 %654
        %658 = vset.pattern.permute.xlu0 0
        %659 = vperm.xlu0 %658, %v585
        %v660 = vpop.permute.xlu0 %659
        %663 = vset.pattern.permute.xlu0 0
        %664 = vperm.xlu0 %663, %v586
        %v665 = vpop.permute.xlu0 %664
        %v668 = vperm.slane %v554, 0
        %v670 = vmul.f32 %v590, %v668
        %v671 = vmul.f32 %v595, %v668
        %v672 = vmul.f32 %v600, %v668
        %v673 = vmul.f32 %v605, %v668
        %v674 = vmul.f32 %v610, %v668
        %v675 = vmul.f32 %v615, %v668
        %v676 = vmul.f32 %v620, %v668
        %v677 = vmul.f32 %v625, %v668
        %v678 = vmul.f32 %v630, %v668
        %v679 = vmul.f32 %v635, %v668
        %v680 = vmul.f32 %v640, %v668
        %v681 = vmul.f32 %v645, %v668
        %v682 = vmul.f32 %v650, %v668
        %v683 = vmul.f32 %v655, %v668
        %v684 = vmul.f32 %v660, %v668
        %v685 = vmul.f32 %v665, %v668
        %v686 = vmul.f32 %v487, %v670
        %v687 = vmul.f32 %v488, %v671
        %v688 = vmul.f32 %v489, %v672
        %v689 = vmul.f32 %v490, %v673
        %v690 = vmul.f32 %v491, %v674
        %v691 = vmul.f32 %v492, %v675
        %v692 = vmul.f32 %v493, %v676
        %v693 = vmul.f32 %v494, %v677
        %v694 = vmul.f32 %v495, %v678
        %v695 = vmul.f32 %v496, %v679
        %v696 = vmul.f32 %v497, %v680
        %v697 = vmul.f32 %v498, %v681
        %v698 = vmul.f32 %v499, %v682
        %v699 = vmul.f32 %v500, %v683
        %v700 = vmul.f32 %v501, %v684
        %v701 = vmul.f32 %v502, %v685
        %703 = vset.pattern.permute.xlu0 0
        %704 = vperm.xlu0 %703, %v521
        %v705 = vpop.permute.xlu0 %704
        %708 = vset.pattern.permute.xlu0 0
        %709 = vperm.xlu0 %708, %v522
        %v710 = vpop.permute.xlu0 %709
        %713 = vset.pattern.permute.xlu0 0
        %714 = vperm.xlu0 %713, %v523
        %v715 = vpop.permute.xlu0 %714
        %718 = vset.pattern.permute.xlu0 0
        %719 = vperm.xlu0 %718, %v524
        %v720 = vpop.permute.xlu0 %719
        %723 = vset.pattern.permute.xlu0 0
        %724 = vperm.xlu0 %723, %v525
        %v725 = vpop.permute.xlu0 %724
        %728 = vset.pattern.permute.xlu0 0
        %729 = vperm.xlu0 %728, %v526
        %v730 = vpop.permute.xlu0 %729
        %733 = vset.pattern.permute.xlu0 0
        %734 = vperm.xlu0 %733, %v527
        %v735 = vpop.permute.xlu0 %734
        %738 = vset.pattern.permute.xlu0 0
        %739 = vperm.xlu0 %738, %v528
        %v740 = vpop.permute.xlu0 %739
        %743 = vset.pattern.permute.xlu0 0
        %744 = vperm.xlu0 %743, %v529
        %v745 = vpop.permute.xlu0 %744
        %748 = vset.pattern.permute.xlu0 0
        %749 = vperm.xlu0 %748, %v530
        %v750 = vpop.permute.xlu0 %749
        %753 = vset.pattern.permute.xlu0 0
        %754 = vperm.xlu0 %753, %v531
        %v755 = vpop.permute.xlu0 %754
        %758 = vset.pattern.permute.xlu0 0
        %759 = vperm.xlu0 %758, %v532
        %v760 = vpop.permute.xlu0 %759
        %763 = vset.pattern.permute.xlu0 0
        %764 = vperm.xlu0 %763, %v533
        %v765 = vpop.permute.xlu0 %764
        %768 = vset.pattern.permute.xlu0 0
        %769 = vperm.xlu0 %768, %v534
        %v770 = vpop.permute.xlu0 %769
        %773 = vset.pattern.permute.xlu0 0
        %774 = vperm.xlu0 %773, %v535
        %v775 = vpop.permute.xlu0 %774
        %778 = vset.pattern.permute.xlu0 0
        %779 = vperm.xlu0 %778, %v536
        %v780 = vpop.permute.xlu0 %779
        %v783 = vperm.slane %v520, 0
        %v785 = vmul.f32 %v705, %v783
        %v786 = vmul.f32 %v710, %v783
        %v787 = vmul.f32 %v715, %v783
        %v788 = vmul.f32 %v720, %v783
        %v789 = vmul.f32 %v725, %v783
        %v790 = vmul.f32 %v730, %v783
        %v791 = vmul.f32 %v735, %v783
        %v792 = vmul.f32 %v740, %v783
        %v793 = vmul.f32 %v745, %v783
        %v794 = vmul.f32 %v750, %v783
        %v795 = vmul.f32 %v755, %v783
        %v796 = vmul.f32 %v760, %v783
        %v797 = vmul.f32 %v765, %v783
        %v798 = vmul.f32 %v770, %v783
        %v799 = vmul.f32 %v775, %v783
        %v800 = vmul.f32 %v780, %v783
        %v801 = vadd.f32 %v686, %v785
        %v802 = vadd.f32 %v687, %v786
        %v803 = vadd.f32 %v688, %v787
        %v804 = vadd.f32 %v689, %v788
        %v805 = vadd.f32 %v690, %v789
        %v806 = vadd.f32 %v691, %v790
        %v807 = vadd.f32 %v692, %v791
        %v808 = vadd.f32 %v693, %v792
        %v809 = vadd.f32 %v694, %v793
        %v810 = vadd.f32 %v695, %v794
        %v811 = vadd.f32 %v696, %v795
        %v812 = vadd.f32 %v697, %v796
        %v813 = vadd.f32 %v698, %v797
        %v814 = vadd.f32 %v699, %v798
        %v815 = vadd.f32 %v700, %v799
        %v816 = vadd.f32 %v701, %v800
        %818 = vset.pattern.permute.xlu0 0
        %819 = vperm.xlu0 %818, %v537
        %v820 = vpop.permute.xlu0 %819
        %823 = vset.pattern.permute.xlu0 0
        %824 = vperm.xlu0 %823, %v538
        %v825 = vpop.permute.xlu0 %824
        %828 = vset.pattern.permute.xlu0 0
        %829 = vperm.xlu0 %828, %v539
        %v830 = vpop.permute.xlu0 %829
        %833 = vset.pattern.permute.xlu0 0
        %834 = vperm.xlu0 %833, %v540
        %v835 = vpop.permute.xlu0 %834
        %838 = vset.pattern.permute.xlu0 0
        %839 = vperm.xlu0 %838, %v541
        %v840 = vpop.permute.xlu0 %839
        %843 = vset.pattern.permute.xlu0 0
        %844 = vperm.xlu0 %843, %v542
        %v845 = vpop.permute.xlu0 %844
        %848 = vset.pattern.permute.xlu0 0
        %849 = vperm.xlu0 %848, %v543
        %v850 = vpop.permute.xlu0 %849
        %853 = vset.pattern.permute.xlu0 0
        %854 = vperm.xlu0 %853, %v544
        %v855 = vpop.permute.xlu0 %854
        %858 = vset.pattern.permute.xlu0 0
        %859 = vperm.xlu0 %858, %v545
        %v860 = vpop.permute.xlu0 %859
        %863 = vset.pattern.permute.xlu0 0
        %864 = vperm.xlu0 %863, %v546
        %v865 = vpop.permute.xlu0 %864
        %868 = vset.pattern.permute.xlu0 0
        %869 = vperm.xlu0 %868, %v547
        %v870 = vpop.permute.xlu0 %869
        %873 = vset.pattern.permute.xlu0 0
        %874 = vperm.xlu0 %873, %v548
        %v875 = vpop.permute.xlu0 %874
        %878 = vset.pattern.permute.xlu0 0
        %879 = vperm.xlu0 %878, %v549
        %v880 = vpop.permute.xlu0 %879
        %883 = vset.pattern.permute.xlu0 0
        %884 = vperm.xlu0 %883, %v550
        %v885 = vpop.permute.xlu0 %884
        %888 = vset.pattern.permute.xlu0 0
        %889 = vperm.xlu0 %888, %v551
        %v890 = vpop.permute.xlu0 %889
        %893 = vset.pattern.permute.xlu0 0
        %894 = vperm.xlu0 %893, %v552
        %v895 = vpop.permute.xlu0 %894
        %v898 = vperm.slane %v519, 0
        %v900 = vmul.f32 %v820, %v898
        %v901 = vmul.f32 %v825, %v898
        %v902 = vmul.f32 %v830, %v898
        %v903 = vmul.f32 %v835, %v898
        %v904 = vmul.f32 %v840, %v898
        %v905 = vmul.f32 %v845, %v898
        %v906 = vmul.f32 %v850, %v898
        %v907 = vmul.f32 %v855, %v898
        %v908 = vmul.f32 %v860, %v898
        %v909 = vmul.f32 %v865, %v898
        %v910 = vmul.f32 %v870, %v898
        %v911 = vmul.f32 %v875, %v898
        %v912 = vmul.f32 %v880, %v898
        %v913 = vmul.f32 %v885, %v898
        %v914 = vmul.f32 %v890, %v898
        %v915 = vmul.f32 %v895, %v898
        %v916 = vadd.f32 %v801, %v900
        %v917 = vadd.f32 %v802, %v901
        %v918 = vadd.f32 %v803, %v902
        %v919 = vadd.f32 %v804, %v903
        %v920 = vadd.f32 %v805, %v904
        %v921 = vadd.f32 %v806, %v905
        %v922 = vadd.f32 %v807, %v906
        %v923 = vadd.f32 %v808, %v907
        %v924 = vadd.f32 %v809, %v908
        %v925 = vadd.f32 %v810, %v909
        %v926 = vadd.f32 %v811, %v910
        %v927 = vadd.f32 %v812, %v911
        %v928 = vadd.f32 %v813, %v912
        %v929 = vadd.f32 %v814, %v913
        %v930 = vadd.f32 %v815, %v914
        %v931 = vadd.f32 %v816, %v915
        %v932 = vmul.f32 %v503, %v916
        %v933 = vmul.f32 %v504, %v917
        %v934 = vmul.f32 %v505, %v918
        %v935 = vmul.f32 %v506, %v919
        %v936 = vmul.f32 %v507, %v920
        %v937 = vmul.f32 %v508, %v921
        %v938 = vmul.f32 %v509, %v922
        %v939 = vmul.f32 %v510, %v923
        %v940 = vmul.f32 %v511, %v924
        %v941 = vmul.f32 %v512, %v925
        %v942 = vmul.f32 %v513, %v926
        %v943 = vmul.f32 %v514, %v927
        %v944 = vmul.f32 %v515, %v928
        %v945 = vmul.f32 %v516, %v929
        %v946 = vmul.f32 %v517, %v930
        %v947 = vmul.f32 %v518, %v931
        %v948 = vld [vmem:[#allocation2] sm:$0x1]
        %v949 = vadd.f32 %v932, %v933
        %v950 = vadd.f32 %v949, %v934
        %v951 = vadd.f32 %v950, %v935
        %v952 = vadd.f32 %v951, %v936
        %v953 = vadd.f32 %v952, %v937
        %v954 = vadd.f32 %v953, %v938
        %v955 = vadd.f32 %v954, %v939
        %v956 = vadd.f32 %v955, %v940
        %v957 = vadd.f32 %v956, %v941
        %v958 = vadd.f32 %v957, %v942
        %v959 = vadd.f32 %v958, %v943
        %v960 = vadd.f32 %v959, %v944
        %v961 = vadd.f32 %v960, %v945
        %v962 = vadd.f32 %v961, %v946
        %v963 = vadd.f32 %v962, %v947
        %v964 = vrot.slane %v963, 4
        %v965 = vadd.f32 %v963, %v964
        %v966 = vrot.slane %v965, 2
        %v967 = vadd.f32 %v965, %v966
        %v968 = vrot.slane %v967, 1
        %v969 = vadd.f32 %v967, %v968
        %v970 = vadd.f32 %v948, %v969
        %971 = vst [vmem:[#allocation2] sm:$0x1] %v970
        %p972 = scmp.eq.s32.totalorder %s28, 1
        // Predicated region
        $region91: #{tpu_custom_call.1} parent=77 // pred_check
          %p973 = pneg %p972
        $region92: #{tpu_custom_call.1} parent=77 // pred_check_branch
          %975 = sbr.rel (%p973) target = $region94
        $region93: #{tpu_custom_call.1} parent=77 // pred_region
          %v976 = vld [vmem:[#allocation2] sm:$0x1]
          %vm977 = vcmask 1040384
          %v978 = vsel %vm977, %v976, 0.0
          %979 = vadd.xlane.f32.xlu0 %v978
          %v980 = vpop.xlane.xlu0 %979
          %v981 = vperm.slane %v980, 0
          %982 = vst [vmem:[%s461] sm:$0xff] %v981
        $region94: #{tpu_custom_call.1} parent=77 // pred_fallthru
          _
        %s983 = sand.u32 %s203, 1
        %s984 = scalar_lea.sflag [#allocation6], %s983
        %s985 = sand.u32 %s203, 1
        %s986 = smul.addr %s985, 8
        %s987 = scalar_lea.vmem [#allocation7], %s986
        // Predicated region
        $region95: #{tpu_custom_call.1} parent=77 // pred_check
          %p988 = pneg %p213
        $region96: #{tpu_custom_call.1} parent=77 // pred_check_branch
          %990 = sbr.rel (%p988) target = $region98
        $region97: #{tpu_custom_call.1} parent=77 // pred_region
          %992 = vsyncadd %s984, 0
          %s993 = smul.addr %s27, 8
          %s994 = scalar_lea.hbm %s6, %s993
          %s996 = sshll.u32 %s987, 4
          %s997 = int_to_ptr.vmem [resolvable:$true] %s996
          %s998 = sshll.u32 %s994, 4
          %s999 = int_to_ptr.hbm [resolvable:$true] %s998
          %1001 = dma.vmem_to_hbm [thread:$0]  %s997, 128, %s999, %s984
        $region98: #{tpu_custom_call.1} parent=77 // pred_fallthru
          _
      $region78: #{tpu_custom_call.1} parent=5 // pred_fallthru
        _
      %p1002 = scmp.le.s32.totalorder 2, %s18
      // Predicated region
      $region99: #{tpu_custom_call.1} parent=5 // pred_check
        %p1003 = pneg %p1002
      $region100: #{tpu_custom_call.1} parent=5 // pred_check_branch
        %1005 = sbr.rel (%p1003) target = $region102
      $region101: #{tpu_custom_call.1} parent=5 // pred_region
        %s1006 = ssub.s32 %s18, 2
        // Predicated region
        $region103: #{tpu_custom_call.1} parent=101 // pred_check
          %p1007 = pneg %p219
        $region104: #{tpu_custom_call.1} parent=101 // pred_check_branch
          %1009 = sbr.rel (%p1007) target = $region106
        $region105: #{tpu_custom_call.1} parent=101 // pred_region
          %s1010 = sand.u32 %s204, 1
          %s1011 = scalar_lea.sflag [#allocation6], %s1010
          %s1012 = sand.u32 %s204, 1
          %s1013 = smul.addr %s1012, 8
          %s1014 = scalar_lea.vmem [#allocation7], %s1013
          %1016 = dma.done %s1011, 128
        $region106: #{tpu_custom_call.1} parent=101 // pred_fallthru
          _
      $region102: #{tpu_custom_call.1} parent=5 // pred_fallthru
        _
    $region6: #{tpu_custom_call.1} parent=1 // loop_footer
      %s22 = sadd.s32 1, %s18
    $region7: #{tpu_custom_call.1} parent=1 // loop_footer_branch
      %17 = sbr.rel target = $region3
    $region8: #{tpu_custom_call.1} parent=1 // loop_exit
      _
    %1017 = vsyncpa [#allocation5], 1
    %s1018 = scalar_lea.sflag [#allocation5], 1
    %1019 = vsyncpa %s1018, 1
    %1020 = vsyncpa [#allocation6], 1
    %s1021 = scalar_lea.sflag [#allocation6], 1
    %1022 = vsyncpa %s1021, 1

</llo_original>
